<compile_context>
chip_gen: v7x
topology: tpu7x:2x2x1
jax: 0.10.0
libtpu: 0.0.40
codegen_flags: <defaults>
</compile_context>

<pallas_src>
import jax
import jax.numpy as jnp
from jax.experimental import pallas as pl
from jax.experimental.pallas import tpu as pltpu


def _round_up(n, m):
    return ((n + m - 1) // m) * m


def residual_mlp_kernel(x_ref, w1_ref, b1_ref, w2_ref, b2_ref, w3_ref, b3_ref, o_ref):
    # x_ref: (bm, in_dim) bf16, w1: (in_dim, H) bf16, w2: (H, H) bf16,
    # w3: (H, out_pad) bf16, biases f32, o_ref: (bm, out_pad) f32.
    x = x_ref[...]

    # fc1 (bf16 MXU, f32 accumulate) + bias + ReLU in f32
    h = jnp.dot(x, w1_ref[...], preferred_element_type=jnp.float32) + b1_ref[...]
    h = jnp.maximum(h, 0.0)
    residual = h

    # fc2 + residual add + ReLU (f32 elementwise)
    h2 = jnp.dot(h.astype(jnp.bfloat16), w2_ref[...],
                 preferred_element_type=jnp.float32) + b2_ref[...]
    h2 = jnp.maximum(h2 + residual, 0.0)

    # fc3 -> lane-dense (padded to 128 lanes) output store
    o_ref[...] = (jnp.dot(h2.astype(jnp.bfloat16), w3_ref[...],
                          preferred_element_type=jnp.float32)
                  + b3_ref[...]).astype(o_ref.dtype)


def residual_nn_forward(x, params, *, block_m=None):
    """x: (B, input_size) float32. params: dict of pre-transposed f32 weights/biases."""
    B, in_dim = x.shape
    H = params["w1"].shape[1]
    out_dim = params["w3"].shape[1]

    # --- M tile: large MXU-friendly tile, grid sharded across TensorCores.
    if block_m is None:
        block_m = min(256, _round_up(B, 8))
    B_pad = _round_up(B, block_m)

    # --- Cast matmul operands to bf16 (f32 accumulation inside the kernel).
    x_p = x
    if B_pad != B:
        x_p = jnp.zeros((B_pad, in_dim), x.dtype).at[:B, :].set(x)
    x_bf = x_p.astype(jnp.bfloat16)

    w1 = params["w1"].astype(jnp.bfloat16)
    w2 = params["w2"].astype(jnp.bfloat16)
    b1 = params["b1"].astype(jnp.float32)
    b2 = params["b2"].astype(jnp.float32)

    # --- Pad fc3 output to a lane-dense width (multiple of 128 lanes).
    out_pad = _round_up(max(out_dim, 128), 128)
    w3 = jnp.zeros((H, out_pad), jnp.bfloat16).at[:, :out_dim].set(
        params["w3"].astype(jnp.bfloat16))
    b3 = jnp.zeros((1, out_pad), jnp.float32).at[:, :out_dim].set(
        params["b3"].astype(jnp.float32))

    grid = (B_pad // block_m,)

    out_full = pl.pallas_call(
        residual_mlp_kernel,
        out_shape=jax.ShapeDtypeStruct((B_pad, out_pad), jnp.float32),
        grid_spec=pltpu.PrefetchScalarGridSpec(
            num_scalar_prefetch=0,
            grid=grid,
            in_specs=[
                pl.BlockSpec((block_m, in_dim), lambda i: (i, 0)),   # x tile
                pl.BlockSpec((in_dim, H), lambda i: (0, 0)),         # w1 (resident)
                pl.BlockSpec((1, H), lambda i: (0, 0)),              # b1
                pl.BlockSpec((H, H), lambda i: (0, 0)),              # w2
                pl.BlockSpec((1, H), lambda i: (0, 0)),              # b2
                pl.BlockSpec((H, out_pad), lambda i: (0, 0)),        # w3 (lane-padded)
                pl.BlockSpec((1, out_pad), lambda i: (0, 0)),        # b3
            ],
            out_specs=pl.BlockSpec((block_m, out_pad), lambda i: (i, 0)),
        ),
        compiler_params=pltpu.CompilerParams(
            dimension_semantics=("parallel",),
            vmem_limit_bytes=64 * 1024 * 1024,
        ),
    )(x_bf, w1, b1, w2, b2, w3, b3)

    # Strip batch padding and the lane padding on the output.
    return out_full[:B, :out_dim]


def init_params(key, input_size, hidden_size, output_size):
    """Deterministic init. Weights stored as (in_features, out_features), f32."""
    ks = jax.random.split(key, 6)

    def uniform(k, shape, fan_in):
        bound = 1.0 / jnp.sqrt(fan_in)
        return jax.random.uniform(k, shape, jnp.float32, -bound, bound)

    return {
        "w1": uniform(ks[0], (input_size, hidden_size), input_size),
        "b1": uniform(ks[1], (1, hidden_size), input_size),
        "w2": uniform(ks[2], (hidden_size, hidden_size), hidden_size),
        "b2": uniform(ks[3], (1, hidden_size), hidden_size),
        "w3": uniform(ks[4], (hidden_size, output_size), hidden_size),
        "b3": uniform(ks[5], (1, output_size), hidden_size),
    }


def reference_forward(x, p):
    h = jnp.maximum(x @ p["w1"] + p["b1"], 0.0)
    r = h
    h = h @ p["w2"] + p["b2"] + r
    h = jnp.maximum(h, 0.0)
    return h @ p["w3"] + p["b3"]


if __name__ == "__main__":
    input_size = 16
    hidden_size = 32
    output_size = 1
    batch = 512  # block_m=256 -> grid=(2,) : even parallel grid for dual-TC chips

    key = jax.random.PRNGKey(0)
    kx, kp = jax.random.split(key)
    x = jax.random.normal(kx, (batch, input_size), jnp.float32)
    params = init_params(kp, input_size, hidden_size, output_size)

    out = residual_nn_forward(x, params)
    out = jax.block_until_ready(out)

    ref = reference_forward(x, params)
    assert out.shape == (batch, output_size)
    # bf16 matmul inputs (f32 accumulation) -> loosened tolerance vs f32 reference.
    assert jnp.allclose(out, ref, atol=2e-2, rtol=2e-2), (
        float(jnp.max(jnp.abs(out - ref))))

    print("KERNEL_OK")
</pallas_src>

<mosaic_0001>
module attributes {stable_mosaic.version = 11 : i64} {
  func.func @residual_mlp_kernel(%arg0: i32, %arg1: memref<256x16xbf16, #tpu.memory_space<vmem>>, %arg2: memref<16x32xbf16, #tpu.memory_space<vmem>>, %arg3: memref<1x32xf32, #tpu.memory_space<vmem>>, %arg4: memref<32x32xbf16, #tpu.memory_space<vmem>>, %arg5: memref<1x32xf32, #tpu.memory_space<vmem>>, %arg6: memref<32x128xbf16, #tpu.memory_space<vmem>>, %arg7: memref<1x128xf32, #tpu.memory_space<vmem>>, %arg8: memref<256x128xf32, #tpu.memory_space<vmem>>) attributes {dimension_semantics = [#tpu.dimension_semantics<parallel>], iteration_bounds = array<i64: 2>, scalar_prefetch = 0 : i64, scratch_operands = 0 : i64, tpu.core_type = #tpu.core_type<tc>, window_params = [{transform_indices = @transform_0, window_bounds = array<i64: 256, 16>}, {pipeline_mode = #tpu.pipeline_mode<synchronous>, transform_indices = @transform_1, window_bounds = array<i64: 16, 32>}, {pipeline_mode = #tpu.pipeline_mode<synchronous>, transform_indices = @transform_2, window_bounds = array<i64: 1, 32>}, {pipeline_mode = #tpu.pipeline_mode<synchronous>, transform_indices = @transform_3, window_bounds = array<i64: 32, 32>}, {pipeline_mode = #tpu.pipeline_mode<synchronous>, transform_indices = @transform_4, window_bounds = array<i64: 1, 32>}, {pipeline_mode = #tpu.pipeline_mode<synchronous>, transform_indices = @transform_5, window_bounds = array<i64: 32, 128>}, {pipeline_mode = #tpu.pipeline_mode<synchronous>, transform_indices = @transform_6, window_bounds = array<i64: 1, 128>}, {transform_indices = @transform_7, window_bounds = array<i64: 256, 128>}]} {
    %c0 = arith.constant 0 : index
    %c0_0 = arith.constant 0 : index
    %0 = vector.load %arg1[%c0, %c0_0] : memref<256x16xbf16, #tpu.memory_space<vmem>>, vector<256x16xbf16>
    %c0_1 = arith.constant 0 : index
    %c0_2 = arith.constant 0 : index
    %1 = vector.load %arg2[%c0_1, %c0_2] : memref<16x32xbf16, #tpu.memory_space<vmem>>, vector<16x32xbf16>
    %cst = arith.constant dense<0.000000e+00> : vector<256x32xf32>
    %2 = tpu.matmul %0, %1, %cst {dimension_numbers = #tpu.dot_dimension_numbers<[1], [0], [0], [1], [0, 0, 1, 1], [], []>} : vector<256x16xbf16>, vector<16x32xbf16>, vector<256x32xf32> -> vector<256x32xf32>
    %c0_3 = arith.constant 0 : index
    %c0_4 = arith.constant 0 : index
    %3 = vector.load %arg3[%c0_3, %c0_4] : memref<1x32xf32, #tpu.memory_space<vmem>>, vector<1x32xf32>
    %4 = vector.broadcast %3 : vector<1x32xf32> to vector<256x32xf32>
    %5 = arith.addf %2, %4 : vector<256x32xf32>
    %cst_5 = arith.constant 0.000000e+00 : f32
    %6 = vector.broadcast %cst_5 : f32 to vector<256x32xf32>
    %7 = arith.maximumf %5, %6 : vector<256x32xf32>
    %8 = arith.truncf %7 : vector<256x32xf32> to vector<256x32xbf16>
    %c0_6 = arith.constant 0 : index
    %c0_7 = arith.constant 0 : index
    %9 = vector.load %arg4[%c0_6, %c0_7] : memref<32x32xbf16, #tpu.memory_space<vmem>>, vector<32x32xbf16>
    %cst_8 = arith.constant dense<0.000000e+00> : vector<256x32xf32>
    %10 = tpu.matmul %8, %9, %cst_8 {dimension_numbers = #tpu.dot_dimension_numbers<[1], [0], [0], [1], [0, 0, 1, 1], [], []>} : vector<256x32xbf16>, vector<32x32xbf16>, vector<256x32xf32> -> vector<256x32xf32>
    %c0_9 = arith.constant 0 : index
    %c0_10 = arith.constant 0 : index
    %11 = vector.load %arg5[%c0_9, %c0_10] : memref<1x32xf32, #tpu.memory_space<vmem>>, vector<1x32xf32>
    %12 = vector.broadcast %11 : vector<1x32xf32> to vector<256x32xf32>
    %13 = arith.addf %10, %12 : vector<256x32xf32>
    %14 = arith.addf %13, %7 : vector<256x32xf32>
    %cst_11 = arith.constant 0.000000e+00 : f32
    %15 = vector.broadcast %cst_11 : f32 to vector<256x32xf32>
    %16 = arith.maximumf %14, %15 : vector<256x32xf32>
    %17 = arith.truncf %16 : vector<256x32xf32> to vector<256x32xbf16>
    %c0_12 = arith.constant 0 : index
    %c0_13 = arith.constant 0 : index
    %18 = vector.load %arg6[%c0_12, %c0_13] : memref<32x128xbf16, #tpu.memory_space<vmem>>, vector<32x128xbf16>
    %cst_14 = arith.constant dense<0.000000e+00> : vector<256x128xf32>
    %19 = tpu.matmul %17, %18, %cst_14 {dimension_numbers = #tpu.dot_dimension_numbers<[1], [0], [0], [1], [0, 0, 1, 1], [], []>} : vector<256x32xbf16>, vector<32x128xbf16>, vector<256x128xf32> -> vector<256x128xf32>
    %c0_15 = arith.constant 0 : index
    %c0_16 = arith.constant 0 : index
    %20 = vector.load %arg7[%c0_15, %c0_16] : memref<1x128xf32, #tpu.memory_space<vmem>>, vector<1x128xf32>
    %21 = vector.broadcast %20 : vector<1x128xf32> to vector<256x128xf32>
    %22 = arith.addf %19, %21 : vector<256x128xf32>
    %c0_17 = arith.constant 0 : index
    %c0_18 = arith.constant 0 : index
    %23 = vector.load %arg8[%c0_17, %c0_18] : memref<256x128xf32, #tpu.memory_space<vmem>>, vector<256x128xf32>
    tpu.vector_store %arg8[%c0_17, %c0_18], %22 {strides = array<i32>} : memref<256x128xf32, #tpu.memory_space<vmem>>, vector<256x128xf32>,
    return
  }
  func.func @transform_0(%arg0: i32) -> (i32, i32) {
    %c0_i32 = arith.constant 0 : i32
    %c0_i32_0 = arith.constant 0 : i32
    return %arg0, %c0_i32 : i32, i32
  }
  func.func @transform_1(%arg0: i32) -> (i32, i32) {
    %c0_i32 = arith.constant 0 : i32
    %c0_i32_0 = arith.constant 0 : i32
    %c0_i32_1 = arith.constant 0 : i32
    return %c0_i32, %c0_i32_0 : i32, i32
  }
  func.func @transform_2(%arg0: i32) -> (i32, i32) {
    %c0_i32 = arith.constant 0 : i32
    %c0_i32_0 = arith.constant 0 : i32
    %c0_i32_1 = arith.constant 0 : i32
    return %c0_i32, %c0_i32_0 : i32, i32
  }
  func.func @transform_3(%arg0: i32) -> (i32, i32) {
    %c0_i32 = arith.constant 0 : i32
    %c0_i32_0 = arith.constant 0 : i32
    %c0_i32_1 = arith.constant 0 : i32
    return %c0_i32, %c0_i32_0 : i32, i32
  }
  func.func @transform_4(%arg0: i32) -> (i32, i32) {
    %c0_i32 = arith.constant 0 : i32
    %c0_i32_0 = arith.constant 0 : i32
    %c0_i32_1 = arith.constant 0 : i32
    return %c0_i32, %c0_i32_0 : i32, i32
  }
  func.func @transform_5(%arg0: i32) -> (i32, i32) {
    %c0_i32 = arith.constant 0 : i32
    %c0_i32_0 = arith.constant 0 : i32
    %c0_i32_1 = arith.constant 0 : i32
    return %c0_i32, %c0_i32_0 : i32, i32
  }
  func.func @transform_6(%arg0: i32) -> (i32, i32) {
    %c0_i32 = arith.constant 0 : i32
    %c0_i32_0 = arith.constant 0 : i32
    %c0_i32_1 = arith.constant 0 : i32
    return %c0_i32, %c0_i32_0 : i32, i32
  }
  func.func @transform_7(%arg0: i32) -> (i32, i32) {
    %c0_i32 = arith.constant 0 : i32
    %c0_i32_0 = arith.constant 0 : i32
    return %arg0, %c0_i32 : i32, i32
  }
}

</mosaic_0001>

<llo_original>
// kernel: tpu_custom_call.1
$region0: #{tpu_custom_call.1}
  #allocation0 [shape = 'u32[]', space=smem, size = 0x4, offset = 0x4, fixed_abs, tag = 'smem constant byte address 0x4 - core index']
  #allocation1 [shape = 'u32[144,128]{1,0:T(1,128)}', space=vmem, size = 0x12000, scoped, tag = 'internal scratch']
  %s0 = inlined_call_operand.hbm [shape: bf16[512,16], index: 0, kind: input, shape index: {}]
  %s1 = inlined_call_operand.hbm [shape: bf16[16,32], index: 1, kind: input, shape index: {}]
  %s2 = inlined_call_operand.hbm [shape: f32[1,32], index: 2, kind: input, shape index: {}]
  %s3 = inlined_call_operand.hbm [shape: bf16[32,32], index: 3, kind: input, shape index: {}]
  %s4 = inlined_call_operand.hbm [shape: f32[1,32], index: 4, kind: input, shape index: {}]
  %s5 = inlined_call_operand.hbm [shape: bf16[32,128], index: 5, kind: input, shape index: {}]
  %s6 = inlined_call_operand.hbm [shape: f32[1,128], index: 6, kind: input, shape index: {}]
  %s7 = inlined_call_operand.hbm [shape: f32[512,128], index: 7, kind: output, shape index: {}]
  %s8 = sld [smem:[#allocation0]]
  $region89: #{tpu_custom_call.1} parent=0
    _
  %s10 = ssub.s32 1, %s8
  %s11 = scalar_select 0, %s10, %s8
  $region1: #{tpu_custom_call.1} parent=0
    #allocation2 [shape = 'u8[131072]{0}', space=vmem, size = 0x20000, scoped, tag = 'input window, operand 0']
    #allocation3 [shape = 's32[2]{0}', space=sflag, size = 0x8, scoped, tag = 'scoped memory for tpu_custom_call.1']
    #allocation4 [shape = 's32[2]{0}', space=sflag, size = 0x8, scoped, tag = 'scoped memory for tpu_custom_call.1']
    #allocation5 [shape = 'u8[4096]{0}', space=vmem, size = 0x1000, scoped, tag = 'input window, operand 1, single buffered']
    #allocation6 [shape = 's32[1]{0}', space=sflag, size = 0x4, scoped, tag = 'scoped memory for tpu_custom_call.1']
    #allocation7 [shape = 'u8[512]{0}', space=vmem, size = 0x400, scoped, tag = 'input window, operand 2, single buffered']
    #allocation8 [shape = 'u8[8192]{0}', space=vmem, size = 0x2000, scoped, tag = 'input window, operand 3, single buffered']
    #allocation9 [shape = 's32[1]{0}', space=sflag, size = 0x4, scoped, tag = 'scoped memory for tpu_custom_call.1']
    #allocation10 [shape = 'u8[512]{0}', space=vmem, size = 0x400, scoped, tag = 'input window, operand 4, single buffered']
    #allocation11 [shape = 'u8[8192]{0}', space=vmem, size = 0x2000, scoped, tag = 'input window, operand 5, single buffered']
    #allocation12 [shape = 's32[1]{0}', space=sflag, size = 0x4, scoped, tag = 'scoped memory for tpu_custom_call.1']
    #allocation13 [shape = 'u8[512]{0}', space=vmem, size = 0x400, scoped, tag = 'input window, operand 6, single buffered']
    #allocation14 [shape = 'u8[262144]{0}', space=vmem, size = 0x40000, scoped, tag = 'output window, operand 0']
    %12 = vsyncpa [#allocation3], 0
    %s13 = scalar_lea.sflag [#allocation3], 1
    %14 = vsyncpa %s13, 0
    %15 = vsyncpa [#allocation6], 0
    %16 = vsyncpa [#allocation9], 0
    %17 = vsyncpa [#allocation12], 0
    %18 = vsyncpa [#allocation4], 0
    %s19 = scalar_lea.sflag [#allocation4], 1
    %20 = vsyncpa %s19, 0
    loop: start=0, step=1, limit=4
    $region2: #{tpu_custom_call.1} parent=1 // loop_pre_header
      _
    $region3: #{tpu_custom_call.1} parent=1 // loop_header
      %s22 = sphi 0, %s26
      %p23 = scmp.ge.s32.totalorder %s22, 4
      %s32 = sphi 0, %s34
      %s35 = sphi 0, %s32
      %s36 = sphi 0, %s35
      %s52 = sphi 0, %s36
      %s56 = sphi 0, %s56
      %s58 = sphi 0, %s56
      %s59 = sphi 0, %s58
      %s73 = sphi 0, %s59
      %s77 = sphi 0, %s77
      %s79 = sphi 0, %s77
      %s80 = sphi 0, %s79
      %s94 = sphi 0, %s80
      %s98 = sphi 0, %s98
      %s100 = sphi 0, %s98
      %s101 = sphi 0, %s100
      %s115 = sphi 0, %s101
      %s119 = sphi 0, %s119
      %s121 = sphi 0, %s119
      %s122 = sphi 0, %s121
      %s136 = sphi 0, %s122
      %s140 = sphi 0, %s140
      %s142 = sphi 0, %s140
      %s143 = sphi 0, %s142
      %s157 = sphi 0, %s143
      %s161 = sphi 0, %s161
      %s163 = sphi 0, %s161
      %s164 = sphi 0, %s163
      %s178 = sphi 0, %s164
      %s184 = sphi 0, %s186
      %s187 = sphi 0, %s184
      %s188 = sphi 0, %s187
      %s204 = sphi 0, %s188
    $region4: #{tpu_custom_call.1} parent=1 // loop_header_branch
      %25 = sbr.rel (%p23) target = $region8
    $region5: #{tpu_custom_call.1} parent=1 // loop_body
      %s27 = ssub.s32 %s22, 1
      %s28 = ssub.s32 %s22, 2
      %s29 = sadd.s32 %s22, 1
      %s30 = ssub.s32 %s22, %s29
      %p31 = scmp.eq.s32.totalorder %s30, 0
      %s33 = sadd.s32 %s32, 1
      %s34 = scalar_select %p31, %s32, %s33
      %p37 = pneg %p31
      %p38 = scmp.eq.s32.totalorder %s22, 1
      %p39 = por %p37, %p38
      %p40 = scmp.ne.s32.totalorder %s32, %s35
      %p41 = scmp.eq.s32.totalorder %s22, 0
      %p42 = por %p40, %p41
      %p43 = scmp.ne.s32.totalorder %s32, %s35
      %p44 = scmp.eq.s32.totalorder %s27, 1
      %p45 = por %p43, %p44
      %p46 = scmp.ne.s32.totalorder %s35, %s36
      %p47 = scmp.eq.s32.totalorder %s27, 0
      %p48 = por %p46, %p47
      %p49 = scmp.ne.s32.totalorder %s35, %s36
      %p50 = scmp.eq.s32.totalorder %s28, 1
      %p51 = por %p49, %p50
      %p53 = scmp.ne.s32.totalorder %s36, %s52
      %p54 = scmp.eq.s32.totalorder %s28, 0
      %p55 = por %p53, %p54
      %s57 = sadd.s32 %s56, 1
      %p60 = scmp.eq.s32.totalorder %s22, 1
      %p61 = scmp.ne.s32.totalorder %s56, %s58
      %p62 = scmp.eq.s32.totalorder %s22, 0
      %p63 = por %p61, %p62
      %p64 = scmp.ne.s32.totalorder %s56, %s58
      %p65 = scmp.eq.s32.totalorder %s27, 1
      %p66 = por %p64, %p65
      %p67 = scmp.ne.s32.totalorder %s58, %s59
      %p68 = scmp.eq.s32.totalorder %s27, 0
      %p69 = por %p67, %p68
      %p70 = scmp.ne.s32.totalorder %s58, %s59
      %p71 = scmp.eq.s32.totalorder %s28, 1
      %p72 = por %p70, %p71
      %p74 = scmp.ne.s32.totalorder %s59, %s73
      %p75 = scmp.eq.s32.totalorder %s28, 0
      %p76 = por %p74, %p75
      %s78 = sadd.s32 %s77, 1
      %p81 = scmp.eq.s32.totalorder %s22, 1
      %p82 = scmp.ne.s32.totalorder %s77, %s79
      %p83 = scmp.eq.s32.totalorder %s22, 0
      %p84 = por %p82, %p83
      %p85 = scmp.ne.s32.totalorder %s77, %s79
      %p86 = scmp.eq.s32.totalorder %s27, 1
      %p87 = por %p85, %p86
      %p88 = scmp.ne.s32.totalorder %s79, %s80
      %p89 = scmp.eq.s32.totalorder %s27, 0
      %p90 = por %p88, %p89
      %p91 = scmp.ne.s32.totalorder %s79, %s80
      %p92 = scmp.eq.s32.totalorder %s28, 1
      %p93 = por %p91, %p92
      %p95 = scmp.ne.s32.totalorder %s80, %s94
      %p96 = scmp.eq.s32.totalorder %s28, 0
      %p97 = por %p95, %p96
      %s99 = sadd.s32 %s98, 1
      %p102 = scmp.eq.s32.totalorder %s22, 1
      %p103 = scmp.ne.s32.totalorder %s98, %s100
      %p104 = scmp.eq.s32.totalorder %s22, 0
      %p105 = por %p103, %p104
      %p106 = scmp.ne.s32.totalorder %s98, %s100
      %p107 = scmp.eq.s32.totalorder %s27, 1
      %p108 = por %p106, %p107
      %p109 = scmp.ne.s32.totalorder %s100, %s101
      %p110 = scmp.eq.s32.totalorder %s27, 0
      %p111 = por %p109, %p110
      %p112 = scmp.ne.s32.totalorder %s100, %s101
      %p113 = scmp.eq.s32.totalorder %s28, 1
      %p114 = por %p112, %p113
      %p116 = scmp.ne.s32.totalorder %s101, %s115
      %p117 = scmp.eq.s32.totalorder %s28, 0
      %p118 = por %p116, %p117
      %s120 = sadd.s32 %s119, 1
      %p123 = scmp.eq.s32.totalorder %s22, 1
      %p124 = scmp.ne.s32.totalorder %s119, %s121
      %p125 = scmp.eq.s32.totalorder %s22, 0
      %p126 = por %p124, %p125
      %p127 = scmp.ne.s32.totalorder %s119, %s121
      %p128 = scmp.eq.s32.totalorder %s27, 1
      %p129 = por %p127, %p128
      %p130 = scmp.ne.s32.totalorder %s121, %s122
      %p131 = scmp.eq.s32.totalorder %s27, 0
      %p132 = por %p130, %p131
      %p133 = scmp.ne.s32.totalorder %s121, %s122
      %p134 = scmp.eq.s32.totalorder %s28, 1
      %p135 = por %p133, %p134
      %p137 = scmp.ne.s32.totalorder %s122, %s136
      %p138 = scmp.eq.s32.totalorder %s28, 0
      %p139 = por %p137, %p138
      %s141 = sadd.s32 %s140, 1
      %p144 = scmp.eq.s32.totalorder %s22, 1
      %p145 = scmp.ne.s32.totalorder %s140, %s142
      %p146 = scmp.eq.s32.totalorder %s22, 0
      %p147 = por %p145, %p146
      %p148 = scmp.ne.s32.totalorder %s140, %s142
      %p149 = scmp.eq.s32.totalorder %s27, 1
      %p150 = por %p148, %p149
      %p151 = scmp.ne.s32.totalorder %s142, %s143
      %p152 = scmp.eq.s32.totalorder %s27, 0
      %p153 = por %p151, %p152
      %p154 = scmp.ne.s32.totalorder %s142, %s143
      %p155 = scmp.eq.s32.totalorder %s28, 1
      %p156 = por %p154, %p155
      %p158 = scmp.ne.s32.totalorder %s143, %s157
      %p159 = scmp.eq.s32.totalorder %s28, 0
      %p160 = por %p158, %p159
      %s162 = sadd.s32 %s161, 1
      %p165 = scmp.eq.s32.totalorder %s22, 1
      %p166 = scmp.ne.s32.totalorder %s161, %s163
      %p167 = scmp.eq.s32.totalorder %s22, 0
      %p168 = por %p166, %p167
      %p169 = scmp.ne.s32.totalorder %s161, %s163
      %p170 = scmp.eq.s32.totalorder %s27, 1
      %p171 = por %p169, %p170
      %p172 = scmp.ne.s32.totalorder %s163, %s164
      %p173 = scmp.eq.s32.totalorder %s27, 0
      %p174 = por %p172, %p173
      %p175 = scmp.ne.s32.totalorder %s163, %s164
      %p176 = scmp.eq.s32.totalorder %s28, 1
      %p177 = por %p175, %p176
      %p179 = scmp.ne.s32.totalorder %s164, %s178
      %p180 = scmp.eq.s32.totalorder %s28, 0
      %p181 = por %p179, %p180
      %s182 = ssub.s32 %s22, %s29
      %p183 = scmp.eq.s32.totalorder %s182, 0
      %s185 = sadd.s32 %s184, 1
      %s186 = scalar_select %p183, %s184, %s185
      %p189 = pneg %p183
      %p190 = scmp.eq.s32.totalorder %s22, 1
      %p191 = por %p189, %p190
      %p192 = scmp.ne.s32.totalorder %s184, %s187
      %p193 = scmp.eq.s32.totalorder %s22, 0
      %p194 = por %p192, %p193
      %p195 = scmp.ne.s32.totalorder %s184, %s187
      %p196 = scmp.eq.s32.totalorder %s27, 1
      %p197 = por %p195, %p196
      %p198 = scmp.ne.s32.totalorder %s187, %s188
      %p199 = scmp.eq.s32.totalorder %s27, 0
      %p200 = por %p198, %p199
      %p201 = scmp.ne.s32.totalorder %s187, %s188
      %p202 = scmp.eq.s32.totalorder %s28, 1
      %p203 = por %p201, %p202
      %p205 = scmp.ne.s32.totalorder %s188, %s204
      %p206 = scmp.eq.s32.totalorder %s28, 0
      %p207 = por %p205, %p206
      %p208 = scmp.le.s32.totalorder 1, %s22
      %p209 = scmp.lt.s32.totalorder %s22, 3
      %p210 = pnand %p208, %p209
      %p211 = pneg %p210
      // Predicated region
      $region9: #{tpu_custom_call.1} parent=5 // pred_check
        _
      $region10: #{tpu_custom_call.1} parent=5 // pred_check_branch
        %213 = sbr.rel (%p210) target = $region12
      $region11: #{tpu_custom_call.1} parent=5 // pred_region
        %s214 = ssub.s32 %s22, 1
        // Predicated region
        $region13: #{tpu_custom_call.1} parent=11 // pred_check
          %p215 = pneg %p69
        $region14: #{tpu_custom_call.1} parent=11 // pred_check_branch
          %217 = sbr.rel (%p215) target = $region16
        $region15: #{tpu_custom_call.1} parent=11 // pred_region
          %s219 = ssub.s32 128, 128
          %220 = vsyncadd [#allocation6], %s219
          %s221 = sshll.u32 [#allocation5], 4
          %s222 = int_to_ptr.vmem [resolvable:$true] %s221
          %227 = dma.hbm_to_vmem [thread:$0]  %s1, 128, %s222, [#allocation6], 64, 64, 4
        $region16: #{tpu_custom_call.1} parent=11 // pred_fallthru
          _
        // Predicated region
        $region17: #{tpu_custom_call.1} parent=11 // pred_check
          %p228 = pneg %p90
        $region18: #{tpu_custom_call.1} parent=11 // pred_check_branch
          %230 = sbr.rel (%p228) target = $region20
        $region19: #{tpu_custom_call.1} parent=11 // pred_region
          %s232 = ssub.s32 16, 16
          %233 = vsyncadd [#allocation6], %s232
          %s235 = sshll.u32 [#allocation7], 4
          %s236 = int_to_ptr.vmem [resolvable:$true] %s235
          %238 = dma.hbm_to_vmem [thread:$0]  %s2, 16, %s236, [#allocation6]
        $region20: #{tpu_custom_call.1} parent=11 // pred_fallthru
          _
        // Predicated region
        $region21: #{tpu_custom_call.1} parent=11 // pred_check
          %p239 = pneg %p111
        $region22: #{tpu_custom_call.1} parent=11 // pred_check_branch
          %241 = sbr.rel (%p239) target = $region24
        $region23: #{tpu_custom_call.1} parent=11 // pred_region
          %s243 = ssub.s32 256, 256
          %244 = vsyncadd [#allocation9], %s243
          %s245 = sshll.u32 [#allocation8], 4
          %s246 = int_to_ptr.vmem [resolvable:$true] %s245
          %251 = dma.hbm_to_vmem [thread:$0]  %s3, 256, %s246, [#allocation9], 64, 64, 4
        $region24: #{tpu_custom_call.1} parent=11 // pred_fallthru
          _
        // Predicated region
        $region25: #{tpu_custom_call.1} parent=11 // pred_check
          %p252 = pneg %p132
        $region26: #{tpu_custom_call.1} parent=11 // pred_check_branch
          %254 = sbr.rel (%p252) target = $region28
        $region27: #{tpu_custom_call.1} parent=11 // pred_region
          %s256 = ssub.s32 16, 16
          %257 = vsyncadd [#allocation9], %s256
          %s259 = sshll.u32 [#allocation10], 4
          %s260 = int_to_ptr.vmem [resolvable:$true] %s259
          %262 = dma.hbm_to_vmem [thread:$0]  %s4, 16, %s260, [#allocation9]
        $region28: #{tpu_custom_call.1} parent=11 // pred_fallthru
          _
        // Predicated region
        $region29: #{tpu_custom_call.1} parent=11 // pred_check
          %p263 = pneg %p153
        $region30: #{tpu_custom_call.1} parent=11 // pred_check_branch
          %265 = sbr.rel (%p263) target = $region32
        $region31: #{tpu_custom_call.1} parent=11 // pred_region
          %s267 = ssub.s32 256, 256
          %268 = vsyncadd [#allocation12], %s267
          %s269 = sshll.u32 [#allocation11], 4
          %s270 = int_to_ptr.vmem [resolvable:$true] %s269
          %275 = dma.hbm_to_vmem [thread:$0]  %s5, 256, %s270, [#allocation12], 64, 64, 4
        $region32: #{tpu_custom_call.1} parent=11 // pred_fallthru
          _
        // Predicated region
        $region33: #{tpu_custom_call.1} parent=11 // pred_check
          %p276 = pneg %p174
        $region34: #{tpu_custom_call.1} parent=11 // pred_check_branch
          %278 = sbr.rel (%p276) target = $region36
        $region35: #{tpu_custom_call.1} parent=11 // pred_region
          %s280 = ssub.s32 16, 16
          %281 = vsyncadd [#allocation12], %s280
          %s283 = sshll.u32 [#allocation13], 4
          %s284 = int_to_ptr.vmem [resolvable:$true] %s283
          %286 = dma.hbm_to_vmem [thread:$0]  %s6, 16, %s284, [#allocation12]
        $region36: #{tpu_custom_call.1} parent=11 // pred_fallthru
          _
      $region12: #{tpu_custom_call.1} parent=5 // pred_fallthru
        _
      %p287 = scmp.lt.s32.totalorder %s22, 2
      // Predicated region
      $region37: #{tpu_custom_call.1} parent=5 // pred_check
        %p288 = pneg %p287
      $region38: #{tpu_custom_call.1} parent=5 // pred_check_branch
        %290 = sbr.rel (%p288) target = $region40
      $region39: #{tpu_custom_call.1} parent=5 // pred_region
        // Predicated region
        $region41: #{tpu_custom_call.1} parent=39 // pred_check
          %p291 = pneg %p42
        $region42: #{tpu_custom_call.1} parent=39 // pred_check_branch
          %293 = sbr.rel (%p291) target = $region44
        $region43: #{tpu_custom_call.1} parent=39 // pred_region
          %s294 = sand.u32 %s32, 1
          %s295 = scalar_lea.sflag [#allocation3], %s294
          %s296 = sand.u32 %s32, 1
          %s297 = smul.addr %s296, 128
          %s298 = scalar_lea.vmem [#allocation2], %s297
          %s299 = smul.u32 32, %s22
          %s301 = ssub.s32 2048, 2048
          %302 = vsyncadd %s295, %s301
          %s303 = smul.addr %s299, 64
          %s304 = scalar_lea.hbm %s0, %s303
          %s305 = sshll.u32 %s298, 4
          %s306 = int_to_ptr.vmem [resolvable:$true] %s305
          %311 = dma.hbm_to_vmem [thread:$0]  %s304, 2048, %s306, %s295, 64, 64, 4
        $region44: #{tpu_custom_call.1} parent=39 // pred_fallthru
          _
      $region40: #{tpu_custom_call.1} parent=5 // pred_fallthru
        _
      %p312 = scmp.le.s32.totalorder 1, %s22
      %p313 = scmp.lt.s32.totalorder %s22, 3
      %p314 = pnand %p312, %p313
      %p315 = pneg %p314
      // Predicated region
      $region45: #{tpu_custom_call.1} parent=5 // pred_check
        _
      $region46: #{tpu_custom_call.1} parent=5 // pred_check_branch
        %317 = sbr.rel (%p314) target = $region48
      $region47: #{tpu_custom_call.1} parent=5 // pred_region
        %s318 = ssub.s32 %s22, 1
        %s319 = sand.u32 %s35, 1
        %s320 = scalar_lea.sflag [#allocation3], %s319
        %s321 = sand.u32 %s35, 1
        %s322 = smul.addr %s321, 128
        %s323 = scalar_lea.vmem [#allocation2], %s322
        // Predicated region
        $region49: #{tpu_custom_call.1} parent=47 // pred_check
          %p324 = pneg %p48
        $region50: #{tpu_custom_call.1} parent=47 // pred_check_branch
          %326 = sbr.rel (%p324) target = $region52
        $region51: #{tpu_custom_call.1} parent=47 // pred_region
          %327 = dma.done %s320, 2048
        $region52: #{tpu_custom_call.1} parent=47 // pred_fallthru
          _
        // Predicated region
        $region53: #{tpu_custom_call.1} parent=47 // pred_check
          %p328 = pneg %p69
        $region54: #{tpu_custom_call.1} parent=47 // pred_check_branch
          %330 = sbr.rel (%p328) target = $region56
        $region55: #{tpu_custom_call.1} parent=47 // pred_region
          %331 = dma.done [#allocation6], 128
        $region56: #{tpu_custom_call.1} parent=47 // pred_fallthru
          _
        // Predicated region
        $region57: #{tpu_custom_call.1} parent=47 // pred_check
          %p332 = pneg %p90
        $region58: #{tpu_custom_call.1} parent=47 // pred_check_branch
          %334 = sbr.rel (%p332) target = $region60
        $region59: #{tpu_custom_call.1} parent=47 // pred_region
          %335 = dma.done [#allocation6], 16
        $region60: #{tpu_custom_call.1} parent=47 // pred_fallthru
          _
        // Predicated region
        $region61: #{tpu_custom_call.1} parent=47 // pred_check
          %p336 = pneg %p111
        $region62: #{tpu_custom_call.1} parent=47 // pred_check_branch
          %338 = sbr.rel (%p336) target = $region64
        $region63: #{tpu_custom_call.1} parent=47 // pred_region
          %339 = dma.done [#allocation9], 256
        $region64: #{tpu_custom_call.1} parent=47 // pred_fallthru
          _
        // Predicated region
        $region65: #{tpu_custom_call.1} parent=47 // pred_check
          %p340 = pneg %p132
        $region66: #{tpu_custom_call.1} parent=47 // pred_check_branch
          %342 = sbr.rel (%p340) target = $region68
        $region67: #{tpu_custom_call.1} parent=47 // pred_region
          %343 = dma.done [#allocation9], 16
        $region68: #{tpu_custom_call.1} parent=47 // pred_fallthru
          _
        // Predicated region
        $region69: #{tpu_custom_call.1} parent=47 // pred_check
          %p344 = pneg %p153
        $region70: #{tpu_custom_call.1} parent=47 // pred_check_branch
          %346 = sbr.rel (%p344) target = $region72
        $region71: #{tpu_custom_call.1} parent=47 // pred_region
          %347 = dma.done [#allocation12], 256
        $region72: #{tpu_custom_call.1} parent=47 // pred_fallthru
          _
        // Predicated region
        $region73: #{tpu_custom_call.1} parent=47 // pred_check
          %p348 = pneg %p174
        $region74: #{tpu_custom_call.1} parent=47 // pred_check_branch
          %350 = sbr.rel (%p348) target = $region76
        $region75: #{tpu_custom_call.1} parent=47 // pred_region
          %351 = dma.done [#allocation12], 16
        $region76: #{tpu_custom_call.1} parent=47 // pred_fallthru
          _
        %s352 = sand.u32 %s35, 1
        %s353 = scalar_lea.sflag [#allocation3], %s352
        %s354 = sand.u32 %s35, 1
        %s355 = smul.addr %s354, 128
        %s356 = scalar_lea.vmem [#allocation2], %s355
        %p357 = pneg %p48
        %p358 = pneg %p45
        %p359 = pneg %p69
        %p360 = pneg %p66
        %p361 = pneg %p90
        %p362 = pneg %p87
        %p363 = pneg %p111
        %p364 = pneg %p108
        %p365 = pneg %p132
        %p366 = pneg %p129
        %p367 = pneg %p153
        %p368 = pneg %p150
        %p369 = pneg %p174
        %p370 = pneg %p171
        %p371 = pneg %p200
        %p372 = pneg %p197
        %s373 = sand.u32 %s187, 1
        %s374 = scalar_lea.sflag [#allocation4], %s373
        %s375 = sand.u32 %s187, 1
        %s376 = smul.addr %s375, 256
        %s377 = scalar_lea.vmem [#allocation14], %s376
        %s378 = smul.u32 32, %s27
        %s379 = smul.u32 32, %s27
        %v381 = vld [vmem:[%s323] sm:$0xf]
        %v382 = vld [vmem:[%s323 + $0x4] sm:$0xf]
        %v383 = vld [vmem:[%s323 + $0x8] sm:$0xf]
        %v384 = vld [vmem:[%s323 + $0xc] sm:$0xf]
        %v385 = vld [vmem:[%s323 + $0x10] sm:$0xf]
        %v386 = vld [vmem:[%s323 + $0x14] sm:$0xf]
        %v387 = vld [vmem:[%s323 + $0x18] sm:$0xf]
        %v388 = vld [vmem:[%s323 + $0x1c] sm:$0xf]
        %v389 = vld [vmem:[%s323 + $0x20] sm:$0xf]
        %v390 = vld [vmem:[%s323 + $0x24] sm:$0xf]
        %v391 = vld [vmem:[%s323 + $0x28] sm:$0xf]
        %v392 = vld [vmem:[%s323 + $0x2c] sm:$0xf]
        %v393 = vld [vmem:[%s323 + $0x30] sm:$0xf]
        %v394 = vld [vmem:[%s323 + $0x34] sm:$0xf]
        %v395 = vld [vmem:[%s323 + $0x38] sm:$0xf]
        %v396 = vld [vmem:[%s323 + $0x3c] sm:$0xf]
        %v397 = vld [vmem:[%s323 + $0x40] sm:$0xf]
        %v398 = vld [vmem:[%s323 + $0x44] sm:$0xf]
        %v399 = vld [vmem:[%s323 + $0x48] sm:$0xf]
        %v400 = vld [vmem:[%s323 + $0x4c] sm:$0xf]
        %v401 = vld [vmem:[%s323 + $0x50] sm:$0xf]
        %v402 = vld [vmem:[%s323 + $0x54] sm:$0xf]
        %v403 = vld [vmem:[%s323 + $0x58] sm:$0xf]
        %v404 = vld [vmem:[%s323 + $0x5c] sm:$0xf]
        %v405 = vld [vmem:[%s323 + $0x60] sm:$0xf]
        %v406 = vld [vmem:[%s323 + $0x64] sm:$0xf]
        %v407 = vld [vmem:[%s323 + $0x68] sm:$0xf]
        %v408 = vld [vmem:[%s323 + $0x6c] sm:$0xf]
        %v409 = vld [vmem:[%s323 + $0x70] sm:$0xf]
        %v410 = vld [vmem:[%s323 + $0x74] sm:$0xf]
        %v411 = vld [vmem:[%s323 + $0x78] sm:$0xf]
        %v412 = vld [vmem:[%s323 + $0x7c] sm:$0xf]
        %v413 = vld [vmem:[#allocation5] sm:$0xf]
        %v414 = vld [vmem:[#allocation5 + $0x4] sm:$0xf]
        %v415 = vld [vmem:[#allocation7] sm:$0x1]
        %v417 = vlaneseq
        %v418 = vshrl.u32 %v417, 7
        %v419 = vsub.s32 0, %v418
        %v420 = vrot.slane %v415, %v419
        %v454 = vunpack.c.l.b16 %v381
        %v455 = vunpack.c.l.b16 %v382
        %v456 = vunpack.c.l.b16 %v383
        %v457 = vunpack.c.l.b16 %v384
        %v458 = vunpack.c.l.b16 %v385
        %v459 = vunpack.c.l.b16 %v386
        %v460 = vunpack.c.l.b16 %v387
        %v461 = vunpack.c.l.b16 %v388
        %v462 = vunpack.c.l.b16 %v389
        %v463 = vunpack.c.l.b16 %v390
        %v464 = vunpack.c.l.b16 %v391
        %v465 = vunpack.c.l.b16 %v392
        %v466 = vunpack.c.l.b16 %v393
        %v467 = vunpack.c.l.b16 %v394
        %v468 = vunpack.c.l.b16 %v395
        %v469 = vunpack.c.l.b16 %v396
        %v470 = vunpack.c.l.b16 %v397
        %v471 = vunpack.c.l.b16 %v398
        %v472 = vunpack.c.l.b16 %v399
        %v473 = vunpack.c.l.b16 %v400
        %v474 = vunpack.c.l.b16 %v401
        %v475 = vunpack.c.l.b16 %v402
        %v476 = vunpack.c.l.b16 %v403
        %v477 = vunpack.c.l.b16 %v404
        %v478 = vunpack.c.l.b16 %v405
        %v479 = vunpack.c.l.b16 %v406
        %v480 = vunpack.c.l.b16 %v407
        %v481 = vunpack.c.l.b16 %v408
        %v482 = vunpack.c.l.b16 %v409
        %v483 = vunpack.c.l.b16 %v410
        %v484 = vunpack.c.l.b16 %v411
        %v485 = vunpack.c.l.b16 %v412
        %v486 = vpack.c.b16 %v455, %v454
        %v487 = vpack.c.b16 %v457, %v456
        %v488 = vpack.c.b16 %v459, %v458
        %v489 = vpack.c.b16 %v461, %v460
        %v490 = vpack.c.b16 %v463, %v462
        %v491 = vpack.c.b16 %v465, %v464
        %v492 = vpack.c.b16 %v467, %v466
        %v493 = vpack.c.b16 %v469, %v468
        %v494 = vpack.c.b16 %v471, %v470
        %v495 = vpack.c.b16 %v473, %v472
        %v496 = vpack.c.b16 %v475, %v474
        %v497 = vpack.c.b16 %v477, %v476
        %v498 = vpack.c.b16 %v479, %v478
        %v499 = vpack.c.b16 %v481, %v480
        %v500 = vpack.c.b16 %v483, %v482
        %v501 = vpack.c.b16 %v485, %v484
        %v504 = vunpack.c.l.b16 %v413
        %v505 = vunpack.c.l.b16 %v414
        %v506 = vpack.c.b16 %v505, %v504
        %vm508 = vcmask 130048
        %v510 = vsel %vm508, %v486, 0
        %v513 = vsel %vm508, %v487, 0
        %v516 = vsel %vm508, %v488, 0
        %v519 = vsel %vm508, %v489, 0
        %v522 = vsel %vm508, %v490, 0
        %v525 = vsel %vm508, %v491, 0
        %v528 = vsel %vm508, %v492, 0
        %v531 = vsel %vm508, %v493, 0
        %v534 = vsel %vm508, %v494, 0
        %v537 = vsel %vm508, %v495, 0
        %v540 = vsel %vm508, %v496, 0
        %v543 = vsel %vm508, %v497, 0
        %v546 = vsel %vm508, %v498, 0
        %v549 = vsel %vm508, %v499, 0
        %v552 = vsel %vm508, %v500, 0
        %v555 = vsel %vm508, %v501, 0
        %557 = vmatprep.subr.bf16.mxu0 0
        %558 = vmatpush1.bf16.msra.mxu0 %v506
        %559 = vmatprep.subr.bf16.mxu0 0
        %560 = vmatpush1.bf16.msra.mxu0 0
        %561 = vmatprep.subr.bf16.mxu0 0
        %562 = vmatpush1.bf16.msra.mxu0 0
        %563 = vmatprep.subr.bf16.mxu0 0
        %564 = vmatpush1.bf16.msra.mxu0 0
        %565 = vmatprep.subr.bf16.mxu0 0
        %566 = vmatpush1.bf16.msra.mxu0 0
        %567 = vmatprep.subr.bf16.mxu0 0
        %568 = vmatpush1.bf16.msra.mxu0 0
        %569 = vmatprep.subr.bf16.mxu0 0
        %570 = vmatpush1.bf16.msra.mxu0 0
        %571 = vmatprep.subr.bf16.mxu0 0
        %572 = vmatpush1.bf16.msra.mxu0 0
        %573 = vmatprep.subr.bf16.mxu0 0
        %574 = vmatpush1.bf16.msra.mxu0 0
        %575 = vmatprep.subr.bf16.mxu0 0
        %576 = vmatpush1.bf16.msra.mxu0 0
        %577 = vmatprep.subr.bf16.mxu0 0
        %578 = vmatpush1.bf16.msra.mxu0 0
        %579 = vmatprep.subr.bf16.mxu0 0
        %580 = vmatpush1.bf16.msra.mxu0 0
        %581 = vmatprep.subr.bf16.mxu0 0
        %582 = vmatpush1.bf16.msra.mxu0 0
        %583 = vmatprep.subr.bf16.mxu0 0
        %584 = vmatpush1.bf16.msra.mxu0 0
        %585 = vmatprep.subr.bf16.mxu0 0
        %586 = vmatpush1.bf16.msra.mxu0 0
        %587 = vmatprep.subr.bf16.mxu0 0
        %588 = vmatpush1.bf16.msra.mxu0 0
        %589 = vmatprep.mubr.bf16.mxu0 0
        %590 = vmatmul.mubr.bf16.gmra.mrb[0].mxu0 %v510
        %v591 = vpop.f32.mrb[0].mxu0
        %v592 = vadd.f32 %v420, %v591
        %v593 = vpop.f32.mrb[0].mxu0
        %v594 = vpop.f32.mrb[0].mxu0
        %v595 = vadd.f32 %v420, %v594
        %v596 = vpop.f32.mrb[0].mxu0
        %597 = vmatprep.mubr.bf16.mxu0 0
        %598 = vmatmul.mubr.bf16.gmra.mrb[0].mxu0 %v513
        %v599 = vpop.f32.mrb[0].mxu0
        %v600 = vadd.f32 %v420, %v599
        %v601 = vpop.f32.mrb[0].mxu0
        %v602 = vpop.f32.mrb[0].mxu0
        %v603 = vadd.f32 %v420, %v602
        %v604 = vpop.f32.mrb[0].mxu0
        %605 = vmatprep.mubr.bf16.mxu0 0
        %606 = vmatmul.mubr.bf16.gmra.mrb[0].mxu0 %v516
        %v607 = vpop.f32.mrb[0].mxu0
        %v608 = vadd.f32 %v420, %v607
        %v609 = vpop.f32.mrb[0].mxu0
        %v610 = vpop.f32.mrb[0].mxu0
        %v611 = vadd.f32 %v420, %v610
        %v612 = vpop.f32.mrb[0].mxu0
        %613 = vmatprep.mubr.bf16.mxu0 0
        %614 = vmatmul.mubr.bf16.gmra.mrb[0].mxu0 %v519
        %v615 = vpop.f32.mrb[0].mxu0
        %v616 = vadd.f32 %v420, %v615
        %v617 = vpop.f32.mrb[0].mxu0
        %v618 = vpop.f32.mrb[0].mxu0
        %v619 = vadd.f32 %v420, %v618
        %v620 = vpop.f32.mrb[0].mxu0
        %621 = vmatprep.mubr.bf16.mxu0 0
        %622 = vmatmul.mubr.bf16.gmra.mrb[0].mxu0 %v522
        %v623 = vpop.f32.mrb[0].mxu0
        %v624 = vadd.f32 %v420, %v623
        %v625 = vpop.f32.mrb[0].mxu0
        %v626 = vpop.f32.mrb[0].mxu0
        %v627 = vadd.f32 %v420, %v626
        %v628 = vpop.f32.mrb[0].mxu0
        %629 = vmatprep.mubr.bf16.mxu0 0
        %630 = vmatmul.mubr.bf16.gmra.mrb[0].mxu0 %v525
        %v631 = vpop.f32.mrb[0].mxu0
        %v632 = vadd.f32 %v420, %v631
        %v633 = vpop.f32.mrb[0].mxu0
        %v634 = vpop.f32.mrb[0].mxu0
        %v635 = vadd.f32 %v420, %v634
        %v636 = vpop.f32.mrb[0].mxu0
        %637 = vmatprep.mubr.bf16.mxu0 0
        %638 = vmatmul.mubr.bf16.gmra.mrb[0].mxu0 %v528
        %v639 = vpop.f32.mrb[0].mxu0
        %v640 = vadd.f32 %v420, %v639
        %v641 = vpop.f32.mrb[0].mxu0
        %v642 = vpop.f32.mrb[0].mxu0
        %v643 = vadd.f32 %v420, %v642
        %v644 = vpop.f32.mrb[0].mxu0
        %645 = vmatprep.mubr.bf16.mxu0 0
        %646 = vmatmul.mubr.bf16.gmra.mrb[0].mxu0 %v531
        %v647 = vpop.f32.mrb[0].mxu0
        %v648 = vadd.f32 %v420, %v647
        %v649 = vpop.f32.mrb[0].mxu0
        %v650 = vpop.f32.mrb[0].mxu0
        %v651 = vadd.f32 %v420, %v650
        %v652 = vpop.f32.mrb[0].mxu0
        %653 = vmatprep.mubr.bf16.mxu0 0
        %654 = vmatmul.mubr.bf16.gmra.mrb[0].mxu0 %v534
        %v655 = vpop.f32.mrb[0].mxu0
        %v656 = vadd.f32 %v420, %v655
        %v657 = vpop.f32.mrb[0].mxu0
        %v658 = vpop.f32.mrb[0].mxu0
        %v659 = vadd.f32 %v420, %v658
        %v660 = vpop.f32.mrb[0].mxu0
        %661 = vmatprep.mubr.bf16.mxu0 0
        %662 = vmatmul.mubr.bf16.gmra.mrb[0].mxu0 %v537
        %v663 = vpop.f32.mrb[0].mxu0
        %v664 = vadd.f32 %v420, %v663
        %v665 = vpop.f32.mrb[0].mxu0
        %v666 = vpop.f32.mrb[0].mxu0
        %v667 = vadd.f32 %v420, %v666
        %v668 = vpop.f32.mrb[0].mxu0
        %669 = vmatprep.mubr.bf16.mxu0 0
        %670 = vmatmul.mubr.bf16.gmra.mrb[0].mxu0 %v540
        %v671 = vpop.f32.mrb[0].mxu0
        %v672 = vadd.f32 %v420, %v671
        %v673 = vpop.f32.mrb[0].mxu0
        %v674 = vpop.f32.mrb[0].mxu0
        %v675 = vadd.f32 %v420, %v674
        %v676 = vpop.f32.mrb[0].mxu0
        %677 = vmatprep.mubr.bf16.mxu0 0
        %678 = vmatmul.mubr.bf16.gmra.mrb[0].mxu0 %v543
        %v679 = vpop.f32.mrb[0].mxu0
        %v680 = vadd.f32 %v420, %v679
        %v681 = vpop.f32.mrb[0].mxu0
        %v682 = vpop.f32.mrb[0].mxu0
        %v683 = vadd.f32 %v420, %v682
        %v684 = vpop.f32.mrb[0].mxu0
        %685 = vmatprep.mubr.bf16.mxu0 0
        %686 = vmatmul.mubr.bf16.gmra.mrb[0].mxu0 %v546
        %v687 = vpop.f32.mrb[0].mxu0
        %v688 = vadd.f32 %v420, %v687
        %v689 = vpop.f32.mrb[0].mxu0
        %v690 = vpop.f32.mrb[0].mxu0
        %v691 = vadd.f32 %v420, %v690
        %v692 = vpop.f32.mrb[0].mxu0
        %693 = vmatprep.mubr.bf16.mxu0 0
        %694 = vmatmul.mubr.bf16.gmra.mrb[0].mxu0 %v549
        %v695 = vpop.f32.mrb[0].mxu0
        %v696 = vadd.f32 %v420, %v695
        %v697 = vpop.f32.mrb[0].mxu0
        %v698 = vpop.f32.mrb[0].mxu0
        %v699 = vadd.f32 %v420, %v698
        %v700 = vpop.f32.mrb[0].mxu0
        %701 = vmatprep.mubr.bf16.mxu0 0
        %702 = vmatmul.mubr.bf16.gmra.mrb[0].mxu0 %v552
        %v703 = vpop.f32.mrb[0].mxu0
        %v704 = vadd.f32 %v420, %v703
        %v705 = vpop.f32.mrb[0].mxu0
        %v706 = vpop.f32.mrb[0].mxu0
        %v707 = vadd.f32 %v420, %v706
        %v708 = vpop.f32.mrb[0].mxu0
        %709 = vmatprep.mubr.bf16.mxu0 0
        %710 = vmatmul.mubr.bf16.gmra.mrb[0].mxu0 %v555
        %v711 = vpop.f32.mrb[0].mxu0
        %v712 = vadd.f32 %v420, %v711
        %v713 = vpop.f32.mrb[0].mxu0
        %v714 = vpop.f32.mrb[0].mxu0
        %v715 = vadd.f32 %v420, %v714
        %v716 = vpop.f32.mrb[0].mxu0
        %717 = vdwg.mxu0
        %v718 = vmax.f32 %v592, 0.0
        %v719 = vmax.f32 %v595, 0.0
        %v720 = vmax.f32 %v600, 0.0
        %v721 = vmax.f32 %v603, 0.0
        %v722 = vmax.f32 %v608, 0.0
        %v723 = vmax.f32 %v611, 0.0
        %v724 = vmax.f32 %v616, 0.0
        %v725 = vmax.f32 %v619, 0.0
        %v726 = vmax.f32 %v624, 0.0
        %v727 = vmax.f32 %v627, 0.0
        %v728 = vmax.f32 %v632, 0.0
        %v729 = vmax.f32 %v635, 0.0
        %v730 = vmax.f32 %v640, 0.0
        %v731 = vmax.f32 %v643, 0.0
        %v732 = vmax.f32 %v648, 0.0
        %v733 = vmax.f32 %v651, 0.0
        %v734 = vmax.f32 %v656, 0.0
        %v735 = vmax.f32 %v659, 0.0
        %v736 = vmax.f32 %v664, 0.0
        %v737 = vmax.f32 %v667, 0.0
        %v738 = vmax.f32 %v672, 0.0
        %v739 = vmax.f32 %v675, 0.0
        %v740 = vmax.f32 %v680, 0.0
        %v741 = vmax.f32 %v683, 0.0
        %v742 = vmax.f32 %v688, 0.0
        %v743 = vmax.f32 %v691, 0.0
        %v744 = vmax.f32 %v696, 0.0
        %v745 = vmax.f32 %v699, 0.0
        %v746 = vmax.f32 %v704, 0.0
        %v747 = vmax.f32 %v707, 0.0
        %v748 = vmax.f32 %v712, 0.0
        %v749 = vmax.f32 %v715, 0.0
        %v750 = vpack.c.bf16 %v719, %v718
        %v751 = vpack.c.bf16 %v721, %v720
        %v752 = vpack.c.bf16 %v723, %v722
        %v753 = vpack.c.bf16 %v725, %v724
        %v754 = vpack.c.bf16 %v727, %v726
        %v755 = vpack.c.bf16 %v729, %v728
        %v756 = vpack.c.bf16 %v731, %v730
        %v757 = vpack.c.bf16 %v733, %v732
        %v758 = vpack.c.bf16 %v735, %v734
        %v759 = vpack.c.bf16 %v737, %v736
        %v760 = vpack.c.bf16 %v739, %v738
        %v761 = vpack.c.bf16 %v741, %v740
        %v762 = vpack.c.bf16 %v743, %v742
        %v763 = vpack.c.bf16 %v745, %v744
        %v764 = vpack.c.bf16 %v747, %v746
        %v765 = vpack.c.bf16 %v749, %v748
        %v766 = vld [vmem:[#allocation8] sm:$0xf]
        %v767 = vld [vmem:[#allocation8 + $0x4] sm:$0xf]
        %v768 = vld [vmem:[#allocation8 + $0x8] sm:$0xf]
        %v769 = vld [vmem:[#allocation8 + $0xc] sm:$0xf]
        %v770 = vld [vmem:[#allocation10] sm:$0x1]
        %v772 = vlaneseq
        %v773 = vshrl.u32 %v772, 7
        %v774 = vsub.s32 0, %v773
        %v775 = vrot.slane %v770, %v774
        %v781 = vunpack.c.l.b16 %v766
        %v782 = vunpack.c.l.b16 %v767
        %v783 = vunpack.c.l.b16 %v768
        %v784 = vunpack.c.l.b16 %v769
        %v785 = vpack.c.b16 %v782, %v781
        %v786 = vpack.c.b16 %v784, %v783
        %vm789 = vcmask 261120
        %v791 = vsel %vm789, %v750, 0
        %v794 = vsel %vm789, %v751, 0
        %v797 = vsel %vm789, %v752, 0
        %v800 = vsel %vm789, %v753, 0
        %v803 = vsel %vm789, %v754, 0
        %v806 = vsel %vm789, %v755, 0
        %v809 = vsel %vm789, %v756, 0
        %v812 = vsel %vm789, %v757, 0
        %v815 = vsel %vm789, %v758, 0
        %v818 = vsel %vm789, %v759, 0
        %v821 = vsel %vm789, %v760, 0
        %v824 = vsel %vm789, %v761, 0
        %v827 = vsel %vm789, %v762, 0
        %v830 = vsel %vm789, %v763, 0
        %v833 = vsel %vm789, %v764, 0
        %v836 = vsel %vm789, %v765, 0
        %838 = vmatprep.subr.bf16.mxu0 0
        %839 = vmatpush1.bf16.msra.mxu0 %v785
        %840 = vmatprep.subr.bf16.mxu0 0
        %841 = vmatpush1.bf16.msra.mxu0 %v786
        %842 = vmatprep.subr.bf16.mxu0 0
        %843 = vmatpush1.bf16.msra.mxu0 0
        %844 = vmatprep.subr.bf16.mxu0 0
        %845 = vmatpush1.bf16.msra.mxu0 0
        %846 = vmatprep.subr.bf16.mxu0 0
        %847 = vmatpush1.bf16.msra.mxu0 0
        %848 = vmatprep.subr.bf16.mxu0 0
        %849 = vmatpush1.bf16.msra.mxu0 0
        %850 = vmatprep.subr.bf16.mxu0 0
        %851 = vmatpush1.bf16.msra.mxu0 0
        %852 = vmatprep.subr.bf16.mxu0 0
        %853 = vmatpush1.bf16.msra.mxu0 0
        %854 = vmatprep.subr.bf16.mxu0 0
        %855 = vmatpush1.bf16.msra.mxu0 0
        %856 = vmatprep.subr.bf16.mxu0 0
        %857 = vmatpush1.bf16.msra.mxu0 0
        %858 = vmatprep.subr.bf16.mxu0 0
        %859 = vmatpush1.bf16.msra.mxu0 0
        %860 = vmatprep.subr.bf16.mxu0 0
        %861 = vmatpush1.bf16.msra.mxu0 0
        %862 = vmatprep.subr.bf16.mxu0 0
        %863 = vmatpush1.bf16.msra.mxu0 0
        %864 = vmatprep.subr.bf16.mxu0 0
        %865 = vmatpush1.bf16.msra.mxu0 0
        %866 = vmatprep.subr.bf16.mxu0 0
        %867 = vmatpush1.bf16.msra.mxu0 0
        %868 = vmatprep.subr.bf16.mxu0 0
        %869 = vmatpush1.bf16.msra.mxu0 0
        %870 = vmatprep.mubr.bf16.mxu0 0
        %871 = vmatmul.mubr.bf16.gmra.mrb[0].mxu0 %v791
        %v872 = vpop.f32.mrb[0].mxu0
        %v873 = vadd.f32 %v775, %v872
        %v874 = vpop.f32.mrb[0].mxu0
        %v875 = vpop.f32.mrb[0].mxu0
        %v876 = vadd.f32 %v775, %v875
        %v877 = vpop.f32.mrb[0].mxu0
        %878 = vmatprep.mubr.bf16.mxu0 0
        %879 = vmatmul.mubr.bf16.gmra.mrb[0].mxu0 %v794
        %v880 = vpop.f32.mrb[0].mxu0
        %v881 = vadd.f32 %v775, %v880
        %v882 = vpop.f32.mrb[0].mxu0
        %v883 = vpop.f32.mrb[0].mxu0
        %v884 = vadd.f32 %v775, %v883
        %v885 = vpop.f32.mrb[0].mxu0
        %886 = vmatprep.mubr.bf16.mxu0 0
        %887 = vmatmul.mubr.bf16.gmra.mrb[0].mxu0 %v797
        %v888 = vpop.f32.mrb[0].mxu0
        %v889 = vadd.f32 %v775, %v888
        %v890 = vpop.f32.mrb[0].mxu0
        %v891 = vpop.f32.mrb[0].mxu0
        %v892 = vadd.f32 %v775, %v891
        %v893 = vpop.f32.mrb[0].mxu0
        %894 = vmatprep.mubr.bf16.mxu0 0
        %895 = vmatmul.mubr.bf16.gmra.mrb[0].mxu0 %v800
        %v896 = vpop.f32.mrb[0].mxu0
        %v897 = vadd.f32 %v775, %v896
        %v898 = vpop.f32.mrb[0].mxu0
        %v899 = vpop.f32.mrb[0].mxu0
        %v900 = vadd.f32 %v775, %v899
        %v901 = vpop.f32.mrb[0].mxu0
        %902 = vmatprep.mubr.bf16.mxu0 0
        %903 = vmatmul.mubr.bf16.gmra.mrb[0].mxu0 %v803
        %v904 = vpop.f32.mrb[0].mxu0
        %v905 = vadd.f32 %v775, %v904
        %v906 = vpop.f32.mrb[0].mxu0
        %v907 = vpop.f32.mrb[0].mxu0
        %v908 = vadd.f32 %v775, %v907
        %v909 = vpop.f32.mrb[0].mxu0
        %910 = vmatprep.mubr.bf16.mxu0 0
        %911 = vmatmul.mubr.bf16.gmra.mrb[0].mxu0 %v806
        %v912 = vpop.f32.mrb[0].mxu0
        %v913 = vadd.f32 %v775, %v912
        %v914 = vpop.f32.mrb[0].mxu0
        %v915 = vpop.f32.mrb[0].mxu0
        %v916 = vadd.f32 %v775, %v915
        %v917 = vpop.f32.mrb[0].mxu0
        %918 = vmatprep.mubr.bf16.mxu0 0
        %919 = vmatmul.mubr.bf16.gmra.mrb[0].mxu0 %v809
        %v920 = vpop.f32.mrb[0].mxu0
        %v921 = vadd.f32 %v775, %v920
        %v922 = vpop.f32.mrb[0].mxu0
        %v923 = vpop.f32.mrb[0].mxu0
        %v924 = vadd.f32 %v775, %v923
        %v925 = vpop.f32.mrb[0].mxu0
        %926 = vmatprep.mubr.bf16.mxu0 0
        %927 = vmatmul.mubr.bf16.gmra.mrb[0].mxu0 %v812
        %v928 = vpop.f32.mrb[0].mxu0
        %v929 = vadd.f32 %v775, %v928
        %v930 = vpop.f32.mrb[0].mxu0
        %v931 = vpop.f32.mrb[0].mxu0
        %v932 = vadd.f32 %v775, %v931
        %v933 = vpop.f32.mrb[0].mxu0
        %934 = vmatprep.mubr.bf16.mxu0 0
        %935 = vmatmul.mubr.bf16.gmra.mrb[0].mxu0 %v815
        %v936 = vpop.f32.mrb[0].mxu0
        %v937 = vadd.f32 %v775, %v936
        %v938 = vpop.f32.mrb[0].mxu0
        %v939 = vpop.f32.mrb[0].mxu0
        %v940 = vadd.f32 %v775, %v939
        %v941 = vpop.f32.mrb[0].mxu0
        %942 = vmatprep.mubr.bf16.mxu0 0
        %943 = vmatmul.mubr.bf16.gmra.mrb[0].mxu0 %v818
        %v944 = vpop.f32.mrb[0].mxu0
        %v945 = vadd.f32 %v775, %v944
        %v946 = vpop.f32.mrb[0].mxu0
        %v947 = vpop.f32.mrb[0].mxu0
        %v948 = vadd.f32 %v775, %v947
        %v949 = vpop.f32.mrb[0].mxu0
        %950 = vmatprep.mubr.bf16.mxu0 0
        %951 = vmatmul.mubr.bf16.gmra.mrb[0].mxu0 %v821
        %v952 = vpop.f32.mrb[0].mxu0
        %v953 = vadd.f32 %v775, %v952
        %v954 = vpop.f32.mrb[0].mxu0
        %v955 = vpop.f32.mrb[0].mxu0
        %v956 = vadd.f32 %v775, %v955
        %v957 = vpop.f32.mrb[0].mxu0
        %958 = vmatprep.mubr.bf16.mxu0 0
        %959 = vmatmul.mubr.bf16.gmra.mrb[0].mxu0 %v824
        %v960 = vpop.f32.mrb[0].mxu0
        %v961 = vadd.f32 %v775, %v960
        %v962 = vpop.f32.mrb[0].mxu0
        %v963 = vpop.f32.mrb[0].mxu0
        %v964 = vadd.f32 %v775, %v963
        %v965 = vpop.f32.mrb[0].mxu0
        %966 = vmatprep.mubr.bf16.mxu0 0
        %967 = vmatmul.mubr.bf16.gmra.mrb[0].mxu0 %v827
        %v968 = vpop.f32.mrb[0].mxu0
        %v969 = vadd.f32 %v775, %v968
        %v970 = vpop.f32.mrb[0].mxu0
        %v971 = vpop.f32.mrb[0].mxu0
        %v972 = vadd.f32 %v775, %v971
        %v973 = vpop.f32.mrb[0].mxu0
        %974 = vmatprep.mubr.bf16.mxu0 0
        %975 = vmatmul.mubr.bf16.gmra.mrb[0].mxu0 %v830
        %v976 = vpop.f32.mrb[0].mxu0
        %v977 = vadd.f32 %v775, %v976
        %v978 = vpop.f32.mrb[0].mxu0
        %v979 = vpop.f32.mrb[0].mxu0
        %v980 = vadd.f32 %v775, %v979
        %v981 = vpop.f32.mrb[0].mxu0
        %982 = vmatprep.mubr.bf16.mxu0 0
        %983 = vmatmul.mubr.bf16.gmra.mrb[0].mxu0 %v833
        %v984 = vpop.f32.mrb[0].mxu0
        %v985 = vadd.f32 %v775, %v984
        %v986 = vpop.f32.mrb[0].mxu0
        %v987 = vpop.f32.mrb[0].mxu0
        %v988 = vadd.f32 %v775, %v987
        %v989 = vpop.f32.mrb[0].mxu0
        %990 = vmatprep.mubr.bf16.mxu0 0
        %991 = vmatmul.mubr.bf16.gmra.mrb[0].mxu0 %v836
        %v992 = vpop.f32.mrb[0].mxu0
        %v993 = vadd.f32 %v775, %v992
        %v994 = vpop.f32.mrb[0].mxu0
        %v995 = vpop.f32.mrb[0].mxu0
        %v996 = vadd.f32 %v775, %v995
        %v997 = vpop.f32.mrb[0].mxu0
        %998 = vdwg.mxu0
        %v999 = vadd.f32 %v873, %v718
        %v1000 = vadd.f32 %v876, %v719
        %v1001 = vadd.f32 %v881, %v720
        %v1002 = vadd.f32 %v884, %v721
        %v1003 = vadd.f32 %v889, %v722
        %v1004 = vadd.f32 %v892, %v723
        %v1005 = vadd.f32 %v897, %v724
        %v1006 = vadd.f32 %v900, %v725
        %v1007 = vadd.f32 %v905, %v726
        %v1008 = vadd.f32 %v908, %v727
        %v1009 = vadd.f32 %v913, %v728
        %v1010 = vadd.f32 %v916, %v729
        %v1011 = vadd.f32 %v921, %v730
        %v1012 = vadd.f32 %v924, %v731
        %v1013 = vadd.f32 %v929, %v732
        %v1014 = vadd.f32 %v932, %v733
        %v1015 = vadd.f32 %v937, %v734
        %v1016 = vadd.f32 %v940, %v735
        %v1017 = vadd.f32 %v945, %v736
        %v1018 = vadd.f32 %v948, %v737
        %v1019 = vadd.f32 %v953, %v738
        %v1020 = vadd.f32 %v956, %v739
        %v1021 = vadd.f32 %v961, %v740
        %v1022 = vadd.f32 %v964, %v741
        %v1023 = vadd.f32 %v969, %v742
        %v1024 = vadd.f32 %v972, %v743
        %v1025 = vadd.f32 %v977, %v744
        %v1026 = vadd.f32 %v980, %v745
        %v1027 = vadd.f32 %v985, %v746
        %v1028 = vadd.f32 %v988, %v747
        %v1029 = vadd.f32 %v993, %v748
        %v1030 = vadd.f32 %v996, %v749
        %v1031 = vmax.f32 %v999, 0.0
        %v1032 = vmax.f32 %v1000, 0.0
        %v1033 = vmax.f32 %v1001, 0.0
        %v1034 = vmax.f32 %v1002, 0.0
        %v1035 = vmax.f32 %v1003, 0.0
        %v1036 = vmax.f32 %v1004, 0.0
        %v1037 = vmax.f32 %v1005, 0.0
        %v1038 = vmax.f32 %v1006, 0.0
        %v1039 = vmax.f32 %v1007, 0.0
        %v1040 = vmax.f32 %v1008, 0.0
        %v1041 = vmax.f32 %v1009, 0.0
        %v1042 = vmax.f32 %v1010, 0.0
        %v1043 = vmax.f32 %v1011, 0.0
        %v1044 = vmax.f32 %v1012, 0.0
        %v1045 = vmax.f32 %v1013, 0.0
        %v1046 = vmax.f32 %v1014, 0.0
        %v1047 = vmax.f32 %v1015, 0.0
        %v1048 = vmax.f32 %v1016, 0.0
        %v1049 = vmax.f32 %v1017, 0.0
        %v1050 = vmax.f32 %v1018, 0.0
        %v1051 = vmax.f32 %v1019, 0.0
        %v1052 = vmax.f32 %v1020, 0.0
        %v1053 = vmax.f32 %v1021, 0.0
        %v1054 = vmax.f32 %v1022, 0.0
        %v1055 = vmax.f32 %v1023, 0.0
        %v1056 = vmax.f32 %v1024, 0.0
        %v1057 = vmax.f32 %v1025, 0.0
        %v1058 = vmax.f32 %v1026, 0.0
        %v1059 = vmax.f32 %v1027, 0.0
        %v1060 = vmax.f32 %v1028, 0.0
        %v1061 = vmax.f32 %v1029, 0.0
        %v1062 = vmax.f32 %v1030, 0.0
        %v1063 = vpack.c.bf16 %v1032, %v1031
        %v1064 = vpack.c.bf16 %v1034, %v1033
        %v1065 = vpack.c.bf16 %v1036, %v1035
        %v1066 = vpack.c.bf16 %v1038, %v1037
        %v1067 = vpack.c.bf16 %v1040, %v1039
        %v1068 = vpack.c.bf16 %v1042, %v1041
        %v1069 = vpack.c.bf16 %v1044, %v1043
        %v1070 = vpack.c.bf16 %v1046, %v1045
        %v1071 = vpack.c.bf16 %v1048, %v1047
        %v1072 = vpack.c.bf16 %v1050, %v1049
        %v1073 = vpack.c.bf16 %v1052, %v1051
        %v1074 = vpack.c.bf16 %v1054, %v1053
        %v1075 = vpack.c.bf16 %v1056, %v1055
        %v1076 = vpack.c.bf16 %v1058, %v1057
        %v1077 = vpack.c.bf16 %v1060, %v1059
        %v1078 = vpack.c.bf16 %v1062, %v1061
        %v1079 = vld [vmem:[#allocation11] sm:$0xf]
        %v1080 = vld [vmem:[#allocation11 + $0x4] sm:$0xf]
        %v1081 = vld [vmem:[#allocation11 + $0x8] sm:$0xf]
        %v1082 = vld [vmem:[#allocation11 + $0xc] sm:$0xf]
        %v1083 = vld [vmem:[#allocation13] sm:$0x1]
        %v1085 = vlaneseq
        %v1086 = vshrl.u32 %v1085, 7
        %v1087 = vsub.s32 0, %v1086
        %v1088 = vrot.slane %v1083, %v1087
        %v1094 = vunpack.c.l.b16 %v1079
        %v1095 = vunpack.c.l.b16 %v1080
        %v1096 = vunpack.c.l.b16 %v1081
        %v1097 = vunpack.c.l.b16 %v1082
        %v1098 = vpack.c.b16 %v1095, %v1094
        %v1099 = vpack.c.b16 %v1097, %v1096
        %v1103 = vsel %vm789, %v1063, 0
        %v1106 = vsel %vm789, %v1064, 0
        %v1109 = vsel %vm789, %v1065, 0
        %v1112 = vsel %vm789, %v1066, 0
        %v1115 = vsel %vm789, %v1067, 0
        %v1118 = vsel %vm789, %v1068, 0
        %v1121 = vsel %vm789, %v1069, 0
        %v1124 = vsel %vm789, %v1070, 0
        %v1127 = vsel %vm789, %v1071, 0
        %v1130 = vsel %vm789, %v1072, 0
        %v1133 = vsel %vm789, %v1073, 0
        %v1136 = vsel %vm789, %v1074, 0
        %v1139 = vsel %vm789, %v1075, 0
        %v1142 = vsel %vm789, %v1076, 0
        %v1145 = vsel %vm789, %v1077, 0
        %v1148 = vsel %vm789, %v1078, 0
        %1150 = vmatprep.subr.bf16.mxu0 0
        %1151 = vmatpush1.bf16.msra.mxu0 %v1098
        %1152 = vmatprep.subr.bf16.mxu0 0
        %1153 = vmatpush1.bf16.msra.mxu0 %v1099
        %1154 = vmatprep.subr.bf16.mxu0 0
        %1155 = vmatpush1.bf16.msra.mxu0 0
        %1156 = vmatprep.subr.bf16.mxu0 0
        %1157 = vmatpush1.bf16.msra.mxu0 0
        %1158 = vmatprep.subr.bf16.mxu0 0
        %1159 = vmatpush1.bf16.msra.mxu0 0
        %1160 = vmatprep.subr.bf16.mxu0 0
        %1161 = vmatpush1.bf16.msra.mxu0 0
        %1162 = vmatprep.subr.bf16.mxu0 0
        %1163 = vmatpush1.bf16.msra.mxu0 0
        %1164 = vmatprep.subr.bf16.mxu0 0
        %1165 = vmatpush1.bf16.msra.mxu0 0
        %1166 = vmatprep.subr.bf16.mxu0 0
        %1167 = vmatpush1.bf16.msra.mxu0 0
        %1168 = vmatprep.subr.bf16.mxu0 0
        %1169 = vmatpush1.bf16.msra.mxu0 0
        %1170 = vmatprep.subr.bf16.mxu0 0
        %1171 = vmatpush1.bf16.msra.mxu0 0
        %1172 = vmatprep.subr.bf16.mxu0 0
        %1173 = vmatpush1.bf16.msra.mxu0 0
        %1174 = vmatprep.subr.bf16.mxu0 0
        %1175 = vmatpush1.bf16.msra.mxu0 0
        %1176 = vmatprep.subr.bf16.mxu0 0
        %1177 = vmatpush1.bf16.msra.mxu0 0
        %1178 = vmatprep.subr.bf16.mxu0 0
        %1179 = vmatpush1.bf16.msra.mxu0 0
        %1180 = vmatprep.subr.bf16.mxu0 0
        %1181 = vmatpush1.bf16.msra.mxu0 0
        %1182 = vmatprep.mubr.bf16.mxu0 0
        %1183 = vmatmul.mubr.bf16.gmra.mrb[0].mxu0 %v1103
        %v1184 = vpop.f32.mrb[0].mxu0
        %v1185 = vadd.f32 %v1088, %v1184
        %v1186 = vpop.f32.mrb[0].mxu0
        %v1187 = vpop.f32.mrb[0].mxu0
        %v1188 = vadd.f32 %v1088, %v1187
        %v1189 = vpop.f32.mrb[0].mxu0
        %1190 = vmatprep.mubr.bf16.mxu0 0
        %1191 = vmatmul.mubr.bf16.gmra.mrb[0].mxu0 %v1106
        %v1192 = vpop.f32.mrb[0].mxu0
        %v1193 = vadd.f32 %v1088, %v1192
        %v1194 = vpop.f32.mrb[0].mxu0
        %v1195 = vpop.f32.mrb[0].mxu0
        %v1196 = vadd.f32 %v1088, %v1195
        %v1197 = vpop.f32.mrb[0].mxu0
        %1198 = vmatprep.mubr.bf16.mxu0 0
        %1199 = vmatmul.mubr.bf16.gmra.mrb[0].mxu0 %v1109
        %v1200 = vpop.f32.mrb[0].mxu0
        %v1201 = vadd.f32 %v1088, %v1200
        %v1202 = vpop.f32.mrb[0].mxu0
        %v1203 = vpop.f32.mrb[0].mxu0
        %v1204 = vadd.f32 %v1088, %v1203
        %v1205 = vpop.f32.mrb[0].mxu0
        %1206 = vmatprep.mubr.bf16.mxu0 0
        %1207 = vmatmul.mubr.bf16.gmra.mrb[0].mxu0 %v1112
        %v1208 = vpop.f32.mrb[0].mxu0
        %v1209 = vadd.f32 %v1088, %v1208
        %v1210 = vpop.f32.mrb[0].mxu0
        %v1211 = vpop.f32.mrb[0].mxu0
        %v1212 = vadd.f32 %v1088, %v1211
        %v1213 = vpop.f32.mrb[0].mxu0
        %1214 = vmatprep.mubr.bf16.mxu0 0
        %1215 = vmatmul.mubr.bf16.gmra.mrb[0].mxu0 %v1115
        %v1216 = vpop.f32.mrb[0].mxu0
        %v1217 = vadd.f32 %v1088, %v1216
        %v1218 = vpop.f32.mrb[0].mxu0
        %v1219 = vpop.f32.mrb[0].mxu0
        %v1220 = vadd.f32 %v1088, %v1219
        %v1221 = vpop.f32.mrb[0].mxu0
        %1222 = vmatprep.mubr.bf16.mxu0 0
        %1223 = vmatmul.mubr.bf16.gmra.mrb[0].mxu0 %v1118
        %v1224 = vpop.f32.mrb[0].mxu0
        %v1225 = vadd.f32 %v1088, %v1224
        %v1226 = vpop.f32.mrb[0].mxu0
        %v1227 = vpop.f32.mrb[0].mxu0
        %v1228 = vadd.f32 %v1088, %v1227
        %v1229 = vpop.f32.mrb[0].mxu0
        %1230 = vmatprep.mubr.bf16.mxu0 0
        %1231 = vmatmul.mubr.bf16.gmra.mrb[0].mxu0 %v1121
        %v1232 = vpop.f32.mrb[0].mxu0
        %v1233 = vadd.f32 %v1088, %v1232
        %v1234 = vpop.f32.mrb[0].mxu0
        %v1235 = vpop.f32.mrb[0].mxu0
        %v1236 = vadd.f32 %v1088, %v1235
        %v1237 = vpop.f32.mrb[0].mxu0
        %1238 = vmatprep.mubr.bf16.mxu0 0
        %1239 = vmatmul.mubr.bf16.gmra.mrb[0].mxu0 %v1124
        %v1240 = vpop.f32.mrb[0].mxu0
        %v1241 = vadd.f32 %v1088, %v1240
        %v1242 = vpop.f32.mrb[0].mxu0
        %v1243 = vpop.f32.mrb[0].mxu0
        %v1244 = vadd.f32 %v1088, %v1243
        %v1245 = vpop.f32.mrb[0].mxu0
        %1246 = vmatprep.mubr.bf16.mxu0 0
        %1247 = vmatmul.mubr.bf16.gmra.mrb[0].mxu0 %v1127
        %v1248 = vpop.f32.mrb[0].mxu0
        %v1249 = vadd.f32 %v1088, %v1248
        %v1250 = vpop.f32.mrb[0].mxu0
        %v1251 = vpop.f32.mrb[0].mxu0
        %v1252 = vadd.f32 %v1088, %v1251
        %v1253 = vpop.f32.mrb[0].mxu0
        %1254 = vmatprep.mubr.bf16.mxu0 0
        %1255 = vmatmul.mubr.bf16.gmra.mrb[0].mxu0 %v1130
        %v1256 = vpop.f32.mrb[0].mxu0
        %v1257 = vadd.f32 %v1088, %v1256
        %v1258 = vpop.f32.mrb[0].mxu0
        %v1259 = vpop.f32.mrb[0].mxu0
        %v1260 = vadd.f32 %v1088, %v1259
        %v1261 = vpop.f32.mrb[0].mxu0
        %1262 = vmatprep.mubr.bf16.mxu0 0
        %1263 = vmatmul.mubr.bf16.gmra.mrb[0].mxu0 %v1133
        %v1264 = vpop.f32.mrb[0].mxu0
        %v1265 = vadd.f32 %v1088, %v1264
        %v1266 = vpop.f32.mrb[0].mxu0
        %v1267 = vpop.f32.mrb[0].mxu0
        %v1268 = vadd.f32 %v1088, %v1267
        %v1269 = vpop.f32.mrb[0].mxu0
        %1270 = vmatprep.mubr.bf16.mxu0 0
        %1271 = vmatmul.mubr.bf16.gmra.mrb[0].mxu0 %v1136
        %v1272 = vpop.f32.mrb[0].mxu0
        %v1273 = vadd.f32 %v1088, %v1272
        %v1274 = vpop.f32.mrb[0].mxu0
        %v1275 = vpop.f32.mrb[0].mxu0
        %v1276 = vadd.f32 %v1088, %v1275
        %v1277 = vpop.f32.mrb[0].mxu0
        %1278 = vmatprep.mubr.bf16.mxu0 0
        %1279 = vmatmul.mubr.bf16.gmra.mrb[0].mxu0 %v1139
        %v1280 = vpop.f32.mrb[0].mxu0
        %v1281 = vadd.f32 %v1088, %v1280
        %v1282 = vpop.f32.mrb[0].mxu0
        %v1283 = vpop.f32.mrb[0].mxu0
        %v1284 = vadd.f32 %v1088, %v1283
        %v1285 = vpop.f32.mrb[0].mxu0
        %1286 = vmatprep.mubr.bf16.mxu0 0
        %1287 = vmatmul.mubr.bf16.gmra.mrb[0].mxu0 %v1142
        %v1288 = vpop.f32.mrb[0].mxu0
        %v1289 = vadd.f32 %v1088, %v1288
        %v1290 = vpop.f32.mrb[0].mxu0
        %v1291 = vpop.f32.mrb[0].mxu0
        %v1292 = vadd.f32 %v1088, %v1291
        %v1293 = vpop.f32.mrb[0].mxu0
        %1294 = vmatprep.mubr.bf16.mxu0 0
        %1295 = vmatmul.mubr.bf16.gmra.mrb[0].mxu0 %v1145
        %v1296 = vpop.f32.mrb[0].mxu0
        %v1297 = vadd.f32 %v1088, %v1296
        %v1298 = vpop.f32.mrb[0].mxu0
        %v1299 = vpop.f32.mrb[0].mxu0
        %v1300 = vadd.f32 %v1088, %v1299
        %v1301 = vpop.f32.mrb[0].mxu0
        %1302 = vmatprep.mubr.bf16.mxu0 0
        %1303 = vmatmul.mubr.bf16.gmra.mrb[0].mxu0 %v1148
        %v1304 = vpop.f32.mrb[0].mxu0
        %v1305 = vadd.f32 %v1088, %v1304
        %v1306 = vpop.f32.mrb[0].mxu0
        %v1307 = vpop.f32.mrb[0].mxu0
        %v1308 = vadd.f32 %v1088, %v1307
        %v1309 = vpop.f32.mrb[0].mxu0
        %1310 = vdwg.mxu0
        %1311 = vst [vmem:[%s377] sm:$0xff] %v1185
        %1312 = vst [vmem:[%s377 + $0x8] sm:$0xff] %v1188
        %1313 = vst [vmem:[%s377 + $0x10] sm:$0xff] %v1193
        %1314 = vst [vmem:[%s377 + $0x18] sm:$0xff] %v1196
        %1315 = vst [vmem:[%s377 + $0x20] sm:$0xff] %v1201
        %1316 = vst [vmem:[%s377 + $0x28] sm:$0xff] %v1204
        %1317 = vst [vmem:[%s377 + $0x30] sm:$0xff] %v1209
        %1318 = vst [vmem:[%s377 + $0x38] sm:$0xff] %v1212
        %1319 = vst [vmem:[%s377 + $0x40] sm:$0xff] %v1217
        %1320 = vst [vmem:[%s377 + $0x48] sm:$0xff] %v1220
        %1321 = vst [vmem:[%s377 + $0x50] sm:$0xff] %v1225
        %1322 = vst [vmem:[%s377 + $0x58] sm:$0xff] %v1228
        %1323 = vst [vmem:[%s377 + $0x60] sm:$0xff] %v1233
        %1324 = vst [vmem:[%s377 + $0x68] sm:$0xff] %v1236
        %1325 = vst [vmem:[%s377 + $0x70] sm:$0xff] %v1241
        %1326 = vst [vmem:[%s377 + $0x78] sm:$0xff] %v1244
        %1327 = vst [vmem:[%s377 + $0x80] sm:$0xff] %v1249
        %1328 = vst [vmem:[%s377 + $0x88] sm:$0xff] %v1252
        %1329 = vst [vmem:[%s377 + $0x90] sm:$0xff] %v1257
        %1330 = vst [vmem:[%s377 + $0x98] sm:$0xff] %v1260
        %1331 = vst [vmem:[%s377 + $0xa0] sm:$0xff] %v1265
        %1332 = vst [vmem:[%s377 + $0xa8] sm:$0xff] %v1268
        %1333 = vst [vmem:[%s377 + $0xb0] sm:$0xff] %v1273
        %1334 = vst [vmem:[%s377 + $0xb8] sm:$0xff] %v1276
        %1335 = vst [vmem:[%s377 + $0xc0] sm:$0xff] %v1281
        %1336 = vst [vmem:[%s377 + $0xc8] sm:$0xff] %v1284
        %1337 = vst [vmem:[%s377 + $0xd0] sm:$0xff] %v1289
        %1338 = vst [vmem:[%s377 + $0xd8] sm:$0xff] %v1292
        %1339 = vst [vmem:[%s377 + $0xe0] sm:$0xff] %v1297
        %1340 = vst [vmem:[%s377 + $0xe8] sm:$0xff] %v1300
        %1341 = vst [vmem:[%s377 + $0xf0] sm:$0xff] %v1305
        %1342 = vst [vmem:[%s377 + $0xf8] sm:$0xff] %v1308
        %s1343 = sand.u32 %s187, 1
        %s1344 = scalar_lea.sflag [#allocation4], %s1343
        %s1345 = sand.u32 %s187, 1
        %s1346 = smul.addr %s1345, 256
        %s1347 = scalar_lea.vmem [#allocation14], %s1346
        // Predicated region
        $region77: #{tpu_custom_call.1} parent=47 // pred_check
          %p1348 = pneg %p197
        $region78: #{tpu_custom_call.1} parent=47 // pred_check_branch
          %1350 = sbr.rel (%p1348) target = $region80
        $region79: #{tpu_custom_call.1} parent=47 // pred_region
          %s1351 = smul.u32 32, %s27
          %s1353 = ssub.s32 4096, 4096
          %1354 = vsyncadd %s1344, %s1353
          %s1355 = smul.addr %s1351, 128
          %s1356 = scalar_lea.hbm %s7, %s1355
          %s1357 = sshll.u32 %s1347, 4
          %s1358 = int_to_ptr.vmem [resolvable:$true] %s1357
          %1363 = dma.vmem_to_hbm [thread:$0]  %s1358, 4096, %s1356, %s1344, 128, 128, 8
        $region80: #{tpu_custom_call.1} parent=47 // pred_fallthru
          _
      $region48: #{tpu_custom_call.1} parent=5 // pred_fallthru
        _
      %p1364 = scmp.le.s32.totalorder 2, %s22
      // Predicated region
      $region81: #{tpu_custom_call.1} parent=5 // pred_check
        %p1365 = pneg %p1364
      $region82: #{tpu_custom_call.1} parent=5 // pred_check_branch
        %1367 = sbr.rel (%p1365) target = $region84
      $region83: #{tpu_custom_call.1} parent=5 // pred_region
        %s1368 = ssub.s32 %s22, 2
        // Predicated region
        $region85: #{tpu_custom_call.1} parent=83 // pred_check
          %p1369 = pneg %p203
        $region86: #{tpu_custom_call.1} parent=83 // pred_check_branch
          %1371 = sbr.rel (%p1369) target = $region88
        $region87: #{tpu_custom_call.1} parent=83 // pred_region
          %s1372 = sand.u32 %s188, 1
          %s1373 = scalar_lea.sflag [#allocation4], %s1372
          %s1374 = sand.u32 %s188, 1
          %s1375 = smul.addr %s1374, 256
          %s1376 = scalar_lea.vmem [#allocation14], %s1375
          %1377 = dma.done %s1373, 4096
        $region88: #{tpu_custom_call.1} parent=83 // pred_fallthru
          _
      $region84: #{tpu_custom_call.1} parent=5 // pred_fallthru
        _
    $region6: #{tpu_custom_call.1} parent=1 // loop_footer
      %s26 = sadd.s32 1, %s22
    $region7: #{tpu_custom_call.1} parent=1 // loop_footer_branch
      %21 = sbr.rel target = $region3
    $region8: #{tpu_custom_call.1} parent=1 // loop_exit
      _
    %1378 = vsyncpa [#allocation3], 1
    %s1379 = scalar_lea.sflag [#allocation3], 1
    %1380 = vsyncpa %s1379, 1
    %1381 = vsyncpa [#allocation6], 1
    %1382 = vsyncpa [#allocation9], 1
    %1383 = vsyncpa [#allocation12], 1
    %1384 = vsyncpa [#allocation4], 1
    %s1385 = scalar_lea.sflag [#allocation4], 1
    %1386 = vsyncpa %s1385, 1

</llo_original>
